<compile_context>
chip_gen: v5e
topology: v5e:2x2
jax: 0.10.0
libtpu: 0.0.40
codegen_flags: <defaults>
</compile_context>

<pallas_src>
import jax
import jax.numpy as jnp
from jax.experimental import pallas as pl
from jax.experimental.pallas import tpu as pltpu

_EPS = 1e-5


def _withbias_ln_kernel(x_ref, w_ref, b_ref, o_ref):
    # x_ref / o_ref: (C, TILE_HW) block;  w_ref / b_ref: (C, 1)
    x = x_ref[...].astype(jnp.float32)
    inv_c = jnp.float32(1.0 / x.shape[0])
    s1 = jnp.sum(x, axis=0, keepdims=True)          # (1, TILE_HW)
    s2 = jnp.sum(x * x, axis=0, keepdims=True)      # (1, TILE_HW)
    mu = s1 * inv_c
    var = s2 * inv_c - mu * mu                      # unbiased=False
    r = jax.lax.rsqrt(var + _EPS)                   # EUP; effectively free
    w = w_ref[...].astype(jnp.float32)              # (C, 1) broadcast over lanes
    b = b_ref[...].astype(jnp.float32)
    o_ref[...] = (((x - mu) * r) * w + b).astype(o_ref.dtype)


def _biasfree_ln_kernel(x_ref, w_ref, o_ref):
    x = x_ref[...].astype(jnp.float32)
    inv_c = jnp.float32(1.0 / x.shape[0])
    s1 = jnp.sum(x, axis=0, keepdims=True)
    s2 = jnp.sum(x * x, axis=0, keepdims=True)
    mu = s1 * inv_c
    var = s2 * inv_c - mu * mu                      # var uses the mean ...
    r = jax.lax.rsqrt(var + _EPS)
    w = w_ref[...].astype(jnp.float32)
    o_ref[...] = ((x * r) * w).astype(o_ref.dtype)  # ... but the output does not subtract it


def _choose_tile_hw(C, HW):
    """Pick the lane-axis tile: big (multi-MiB) but VMEM-safe on v5e/v6e/v7x."""
    budget_bytes = 4 * 1024 * 1024                  # per (C, TILE_HW) f32 block
    cap = budget_bytes // max(C * 4, 1)
    cap = max(128, (cap // 128) * 128)              # keep lane axis a multiple of 128
    if HW <= cap:
        return HW                                   # full spatial axis in one block
    return cap                                      # partial last block handled by Pallas


def layernorm_nchw(x, weight, bias=None, *, tile_hw=None):
    """Equivalent of LayerNorm(dim, 'WithBias'/'BiasFree').forward on NCHW input."""
    B, C, H, W = x.shape
    HW = H * W
    x3 = x.reshape(B, C, HW)                        # free reshape, no transpose
    if tile_hw is None:
        tile_hw = _choose_tile_hw(C, HW)
    grid = (B, pl.cdiv(HW, tile_hw))

    x_spec = pl.BlockSpec((None, C, tile_hw), lambda b, j: (b, 0, j))
    o_spec = pl.BlockSpec((None, C, tile_hw), lambda b, j: (b, 0, j))
    p_spec = pl.BlockSpec((C, 1), lambda b, j: (0, 0))

    args = [x3, weight.reshape(C, 1)]
    in_specs = [x_spec, p_spec]
    kernel = _biasfree_ln_kernel
    if bias is not None:
        args.append(bias.reshape(C, 1))
        in_specs.append(p_spec)
        kernel = _withbias_ln_kernel

    y3 = pl.pallas_call(
        kernel,
        out_shape=jax.ShapeDtypeStruct((B, C, HW), x.dtype),
        grid_spec=pltpu.PrefetchScalarGridSpec(
            num_scalar_prefetch=0,
            grid=grid,
            in_specs=in_specs,
            out_specs=o_spec,
        ),
        compiler_params=pltpu.CompilerParams(
            dimension_semantics=("parallel", "parallel")),
    )(*args)
    return y3.reshape(B, C, H, W)


def _reference(x, weight, bias):
    C = x.shape[1]
    mu = jnp.mean(x, axis=1, keepdims=True)
    var = jnp.mean((x - mu) ** 2, axis=1, keepdims=True)
    w = weight.reshape(1, C, 1, 1)
    if bias is None:
        return x / jnp.sqrt(var + _EPS) * w
    return (x - mu) / jnp.sqrt(var + _EPS) * w + bias.reshape(1, C, 1, 1)


if __name__ == "__main__":
    key = jax.random.PRNGKey(0)

    # Small shapes consistent with the module: batch=2, channels(dim)=32, spatial=16x16
    B, C, H, W = 2, 32, 16, 16
    k1, k2, k3, k4 = jax.random.split(key, 4)
    x = jax.random.normal(k1, (B, C, H, W), dtype=jnp.float32)

    # Module default init: weight = ones(dim), bias = zeros(dim)
    weight = jnp.ones((C,), dtype=jnp.float32)
    bias = jnp.zeros((C,), dtype=jnp.float32)

    # WithBias variant (default), default init
    y = jax.block_until_ready(layernorm_nchw(x, weight, bias))
    assert y.shape == (B, C, H, W)
    assert jnp.max(jnp.abs(y - _reference(x, weight, bias))) < 1e-4

    # WithBias with non-trivial affine params (exercises the (C,1) broadcast)
    w_r = jax.random.normal(k2, (C,), dtype=jnp.float32)
    b_r = jax.random.normal(k3, (C,), dtype=jnp.float32)
    y2 = jax.block_until_ready(layernorm_nchw(x, w_r, b_r))
    assert jnp.max(jnp.abs(y2 - _reference(x, w_r, b_r))) < 1e-4

    # BiasFree variant
    y3 = jax.block_until_ready(layernorm_nchw(x, w_r, None))
    assert jnp.max(jnp.abs(y3 - _reference(x, w_r, None))) < 1e-4

    # Exercise the multi-tile + partial-last-block path (HW=400, tile_hw=128)
    Hp, Wp = 20, 20
    xp = jax.random.normal(k4, (B, C, Hp, Wp), dtype=jnp.float32)
    y4 = jax.block_until_ready(layernorm_nchw(xp, w_r, b_r, tile_hw=128))
    assert jnp.max(jnp.abs(y4 - _reference(xp, w_r, b_r))) < 1e-4

    print("KERNEL_OK")
</pallas_src>

<mosaic_0001>
module attributes {stable_mosaic.version = 11 : i64} {
  func.func @_withbias_ln_kernel(%arg0: i32, %arg1: i32, %arg2: memref<1x32x256xf32, #tpu.memory_space<vmem>>, %arg3: memref<32x1xf32, #tpu.memory_space<vmem>>, %arg4: memref<32x1xf32, #tpu.memory_space<vmem>>, %arg5: memref<1x32x256xf32, #tpu.memory_space<vmem>>) attributes {dimension_semantics = [#tpu.dimension_semantics<parallel>, #tpu.dimension_semantics<parallel>], iteration_bounds = array<i64: 2, 1>, scalar_prefetch = 0 : i64, scratch_operands = 0 : i64, tpu.core_type = #tpu.core_type<tc>, window_params = [{transform_indices = @transform_0, window_bounds = array<i64: 1, 32, 256>}, {pipeline_mode = #tpu.pipeline_mode<synchronous>, transform_indices = @transform_1, window_bounds = array<i64: 32, 1>}, {pipeline_mode = #tpu.pipeline_mode<synchronous>, transform_indices = @transform_2, window_bounds = array<i64: 32, 1>}, {transform_indices = @transform_3, window_bounds = array<i64: 1, 32, 256>}]} {
    %c0 = arith.constant 0 : index
    %c0_0 = arith.constant 0 : index
    %c0_1 = arith.constant 0 : index
    %0 = vector.load %arg2[%c0, %c0_0, %c0_1] : memref<1x32x256xf32, #tpu.memory_space<vmem>>, vector<1x32x256xf32>
    %1 = vector.shape_cast %0 : vector<1x32x256xf32> to vector<32x256xf32>
    %cst = arith.constant dense<0.000000e+00> : vector<256xf32>
    %2 = vector.multi_reduction <add>, %1, %cst [0] : vector<32x256xf32> to vector<256xf32>
    %3 = vector.shape_cast %2 : vector<256xf32> to vector<1x256xf32>
    %4 = arith.mulf %1, %1 : vector<32x256xf32>
    %cst_2 = arith.constant dense<0.000000e+00> : vector<256xf32>
    %5 = vector.multi_reduction <add>, %4, %cst_2 [0] : vector<32x256xf32> to vector<256xf32>
    %6 = vector.shape_cast %5 : vector<256xf32> to vector<1x256xf32>
    %cst_3 = arith.constant 3.125000e-02 : f32
    %7 = vector.broadcast %cst_3 : f32 to vector<1x256xf32>
    %8 = arith.mulf %3, %7 : vector<1x256xf32>
    %cst_4 = arith.constant 3.125000e-02 : f32
    %9 = vector.broadcast %cst_4 : f32 to vector<1x256xf32>
    %10 = arith.mulf %6, %9 : vector<1x256xf32>
    %11 = arith.mulf %8, %8 : vector<1x256xf32>
    %12 = arith.subf %10, %11 : vector<1x256xf32>
    %cst_5 = arith.constant 9.99999974E-6 : f32
    %13 = vector.broadcast %cst_5 : f32 to vector<1x256xf32>
    %14 = arith.addf %12, %13 : vector<1x256xf32>
    %15 = math.rsqrt %14 : vector<1x256xf32>
    %c0_6 = arith.constant 0 : index
    %c0_7 = arith.constant 0 : index
    %16 = vector.load %arg3[%c0_6, %c0_7] : memref<32x1xf32, #tpu.memory_space<vmem>>, vector<32x1xf32>
    %c0_8 = arith.constant 0 : index
    %c0_9 = arith.constant 0 : index
    %17 = vector.load %arg4[%c0_8, %c0_9] : memref<32x1xf32, #tpu.memory_space<vmem>>, vector<32x1xf32>
    %18 = vector.broadcast %8 : vector<1x256xf32> to vector<32x256xf32>
    %19 = arith.subf %1, %18 : vector<32x256xf32>
    %20 = vector.broadcast %15 : vector<1x256xf32> to vector<32x256xf32>
    %21 = arith.mulf %19, %20 : vector<32x256xf32>
    %22 = vector.broadcast %16 : vector<32x1xf32> to vector<32x256xf32>
    %23 = arith.mulf %21, %22 : vector<32x256xf32>
    %24 = vector.broadcast %17 : vector<32x1xf32> to vector<32x256xf32>
    %25 = arith.addf %23, %24 : vector<32x256xf32>
    %c0_10 = arith.constant 0 : index
    %c0_11 = arith.constant 0 : index
    %c0_12 = arith.constant 0 : index
    %26 = vector.load %arg5[%c0_10, %c0_11, %c0_12] : memref<1x32x256xf32, #tpu.memory_space<vmem>>, vector<1x32x256xf32>
    %27 = vector.shape_cast %26 : vector<1x32x256xf32> to vector<32x256xf32>
    %28 = vector.shape_cast %25 : vector<32x256xf32> to vector<1x32x256xf32>
    tpu.vector_store %arg5[%c0_10, %c0_11, %c0_12], %28 {strides = array<i32>} : memref<1x32x256xf32, #tpu.memory_space<vmem>>, vector<1x32x256xf32>,
    return
  }
  func.func @transform_0(%arg0: i32, %arg1: i32) -> (i32, i32, i32) {
    %c0_i32 = arith.constant 0 : i32
    %c0_i32_0 = arith.constant 0 : i32
    return %arg0, %c0_i32, %arg1 : i32, i32, i32
  }
  func.func @transform_1(%arg0: i32, %arg1: i32) -> (i32, i32) {
    %c0_i32 = arith.constant 0 : i32
    %c0_i32_0 = arith.constant 0 : i32
    %c0_i32_1 = arith.constant 0 : i32
    return %c0_i32, %c0_i32_0 : i32, i32
  }
  func.func @transform_2(%arg0: i32, %arg1: i32) -> (i32, i32) {
    %c0_i32 = arith.constant 0 : i32
    %c0_i32_0 = arith.constant 0 : i32
    %c0_i32_1 = arith.constant 0 : i32
    return %c0_i32, %c0_i32_0 : i32, i32
  }
  func.func @transform_3(%arg0: i32, %arg1: i32) -> (i32, i32, i32) {
    %c0_i32 = arith.constant 0 : i32
    %c0_i32_0 = arith.constant 0 : i32
    return %arg0, %c0_i32, %arg1 : i32, i32, i32
  }
}

</mosaic_0001>

<llo_original>
// kernel: tpu_custom_call.1
$region0: #{tpu_custom_call.1}
  #allocation0 [shape = 'u32[]', space=smem, size = 0x4, offset = 0x4, fixed_abs, tag = 'smem constant byte address 0x4 - core index']
  #allocation1 [shape = 'u32[72,128]{1,0:T(1,128)}', space=vmem, size = 0x9000, scoped, tag = 'internal scratch']
  %s0 = inlined_call_operand.hbm [shape: f32[2,32,256], index: 0, kind: input, shape index: {}]
  %s1 = inlined_call_operand.vmem [shape: f32[32,1], index: 1, kind: input, shape index: {}]
  %s2 = inlined_call_operand.vmem [shape: f32[32,1], index: 2, kind: input, shape index: {}]
  %s3 = inlined_call_operand.hbm [shape: f32[2,32,256], index: 3, kind: output, shape index: {}]
  %s4 = sld [smem:[#allocation0]]
  $region49: #{tpu_custom_call.1} parent=0
    _
  %s6 = ssub.s32 1, %s4
  %s7 = scalar_select 0, %s6, %s4
  $region1: #{tpu_custom_call.1} parent=0
    #allocation2 [shape = 'u8[65536]{0}', space=vmem, size = 0x10000, scoped, tag = 'input window, operand 0']
    #allocation3 [shape = 's32[2]{0}', space=sflag, size = 0x8, scoped, tag = 'scoped memory for tpu_custom_call.1']
    #allocation4 [shape = 's32[2]{0}', space=sflag, size = 0x8, scoped, tag = 'scoped memory for tpu_custom_call.1']
    #allocation5 [shape = 'u8[65536]{0}', space=vmem, size = 0x10000, scoped, tag = 'output window, operand 0']
    %8 = vsyncpa [#allocation3], 0
    %s9 = scalar_lea.sflag [#allocation3], 1
    %10 = vsyncpa %s9, 0
    %11 = vsyncpa [#allocation4], 0
    %s12 = scalar_lea.sflag [#allocation4], 1
    %13 = vsyncpa %s12, 0
    loop: start=0, step=1, limit=4
    $region2: #{tpu_custom_call.1} parent=1 // loop_pre_header
      _
    $region3: #{tpu_custom_call.1} parent=1 // loop_header
      %s15 = sphi 0, %s19
      %p16 = scmp.ge.s32.totalorder %s15, 4
      %s22 = sphi 0, %s34
      %s23 = sphi 0, %s30
      %s24 = sphi 0, %s22
      %s25 = sphi 0, %s23
      %s26 = sphi 0, %s24
      %s27 = sphi 0, %s25
      %s39 = sphi 0, %s41
      %s42 = sphi 0, %s39
      %s43 = sphi 0, %s42
      %s59 = sphi 0, %s43
      %s63 = sphi 0, %s63
      %s65 = sphi 0, %s63
      %s66 = sphi 0, %s65
      %s80 = sphi 0, %s66
      %s84 = sphi 0, %s84
      %s86 = sphi 0, %s84
      %s87 = sphi 0, %s86
      %s101 = sphi 0, %s87
      %s109 = sphi 0, %s111
      %s112 = sphi 0, %s109
      %s113 = sphi 0, %s112
      %s129 = sphi 0, %s113
    $region4: #{tpu_custom_call.1} parent=1 // loop_header_branch
      %18 = sbr.rel (%p16) target = $region8
    $region5: #{tpu_custom_call.1} parent=1 // loop_body
      %s20 = ssub.s32 %s15, 1
      %s21 = ssub.s32 %s15, 2
      %s28 = sadd.s32 1, %s23
      %p29 = scmp.ge.s32.totalorder %s28, 1
      %s30 = scalar_select %p29, 0, %s28
      %s31 = sadd.s32 1, %s22
      %s32 = scalar_select %p29, %s31, %s22
      %p33 = scmp.ge.s32.totalorder %s32, 2
      %s34 = scalar_select %p33, 0, %s32
      %s35 = ssub.s32 %s22, %s34
      %s36 = ssub.s32 %s23, %s30
      %s37 = sor.u32 %s35, %s36
      %p38 = scmp.eq.s32.totalorder %s37, 0
      %s40 = sadd.s32 %s39, 1
      %s41 = scalar_select %p38, %s39, %s40
      %p44 = pneg %p38
      %p45 = scmp.eq.s32.totalorder %s15, 1
      %p46 = por %p44, %p45
      %p47 = scmp.ne.s32.totalorder %s39, %s42
      %p48 = scmp.eq.s32.totalorder %s15, 0
      %p49 = por %p47, %p48
      %p50 = scmp.ne.s32.totalorder %s39, %s42
      %p51 = scmp.eq.s32.totalorder %s20, 1
      %p52 = por %p50, %p51
      %p53 = scmp.ne.s32.totalorder %s42, %s43
      %p54 = scmp.eq.s32.totalorder %s20, 0
      %p55 = por %p53, %p54
      %p56 = scmp.ne.s32.totalorder %s42, %s43
      %p57 = scmp.eq.s32.totalorder %s21, 1
      %p58 = por %p56, %p57
      %p60 = scmp.ne.s32.totalorder %s43, %s59
      %p61 = scmp.eq.s32.totalorder %s21, 0
      %p62 = por %p60, %p61
      %s64 = sadd.s32 %s63, 1
      %p67 = scmp.eq.s32.totalorder %s15, 1
      %p68 = scmp.ne.s32.totalorder %s63, %s65
      %p69 = scmp.eq.s32.totalorder %s15, 0
      %p70 = por %p68, %p69
      %p71 = scmp.ne.s32.totalorder %s63, %s65
      %p72 = scmp.eq.s32.totalorder %s20, 1
      %p73 = por %p71, %p72
      %p74 = scmp.ne.s32.totalorder %s65, %s66
      %p75 = scmp.eq.s32.totalorder %s20, 0
      %p76 = por %p74, %p75
      %p77 = scmp.ne.s32.totalorder %s65, %s66
      %p78 = scmp.eq.s32.totalorder %s21, 1
      %p79 = por %p77, %p78
      %p81 = scmp.ne.s32.totalorder %s66, %s80
      %p82 = scmp.eq.s32.totalorder %s21, 0
      %p83 = por %p81, %p82
      %s85 = sadd.s32 %s84, 1
      %p88 = scmp.eq.s32.totalorder %s15, 1
      %p89 = scmp.ne.s32.totalorder %s84, %s86
      %p90 = scmp.eq.s32.totalorder %s15, 0
      %p91 = por %p89, %p90
      %p92 = scmp.ne.s32.totalorder %s84, %s86
      %p93 = scmp.eq.s32.totalorder %s20, 1
      %p94 = por %p92, %p93
      %p95 = scmp.ne.s32.totalorder %s86, %s87
      %p96 = scmp.eq.s32.totalorder %s20, 0
      %p97 = por %p95, %p96
      %p98 = scmp.ne.s32.totalorder %s86, %s87
      %p99 = scmp.eq.s32.totalorder %s21, 1
      %p100 = por %p98, %p99
      %p102 = scmp.ne.s32.totalorder %s87, %s101
      %p103 = scmp.eq.s32.totalorder %s21, 0
      %p104 = por %p102, %p103
      %s105 = ssub.s32 %s22, %s34
      %s106 = ssub.s32 %s23, %s30
      %s107 = sor.u32 %s105, %s106
      %p108 = scmp.eq.s32.totalorder %s107, 0
      %s110 = sadd.s32 %s109, 1
      %s111 = scalar_select %p108, %s109, %s110
      %p114 = pneg %p108
      %p115 = scmp.eq.s32.totalorder %s15, 1
      %p116 = por %p114, %p115
      %p117 = scmp.ne.s32.totalorder %s109, %s112
      %p118 = scmp.eq.s32.totalorder %s15, 0
      %p119 = por %p117, %p118
      %p120 = scmp.ne.s32.totalorder %s109, %s112
      %p121 = scmp.eq.s32.totalorder %s20, 1
      %p122 = por %p120, %p121
      %p123 = scmp.ne.s32.totalorder %s112, %s113
      %p124 = scmp.eq.s32.totalorder %s20, 0
      %p125 = por %p123, %p124
      %p126 = scmp.ne.s32.totalorder %s112, %s113
      %p127 = scmp.eq.s32.totalorder %s21, 1
      %p128 = por %p126, %p127
      %p130 = scmp.ne.s32.totalorder %s113, %s129
      %p131 = scmp.eq.s32.totalorder %s21, 0
      %p132 = por %p130, %p131
      %p133 = scmp.le.s32.totalorder 1, %s15
      %p134 = scmp.lt.s32.totalorder %s15, 3
      %p135 = pnand %p133, %p134
      %p136 = pneg %p135
      // Predicated region
      $region9: #{tpu_custom_call.1} parent=5 // pred_check
        _
      $region10: #{tpu_custom_call.1} parent=5 // pred_check_branch
        %138 = sbr.rel (%p135) target = $region12
      $region11: #{tpu_custom_call.1} parent=5 // pred_region
        %s139 = ssub.s32 %s15, 1
        // Predicated region
        $region13: #{tpu_custom_call.1} parent=11 // pred_check
          %p140 = pneg %p76
        $region14: #{tpu_custom_call.1} parent=11 // pred_check_branch
          %142 = sbr.rel (%p140) target = $region16
        $region15: #{tpu_custom_call.1} parent=11 // pred_region
          _
        $region16: #{tpu_custom_call.1} parent=11 // pred_fallthru
          _
        // Predicated region
        $region17: #{tpu_custom_call.1} parent=11 // pred_check
          %p143 = pneg %p97
        $region18: #{tpu_custom_call.1} parent=11 // pred_check_branch
          %145 = sbr.rel (%p143) target = $region20
        $region19: #{tpu_custom_call.1} parent=11 // pred_region
          _
        $region20: #{tpu_custom_call.1} parent=11 // pred_fallthru
          _
      $region12: #{tpu_custom_call.1} parent=5 // pred_fallthru
        _
      %p146 = scmp.lt.s32.totalorder %s15, 2
      // Predicated region
      $region21: #{tpu_custom_call.1} parent=5 // pred_check
        %p147 = pneg %p146
      $region22: #{tpu_custom_call.1} parent=5 // pred_check_branch
        %149 = sbr.rel (%p147) target = $region24
      $region23: #{tpu_custom_call.1} parent=5 // pred_region
        // Predicated region
        $region25: #{tpu_custom_call.1} parent=23 // pred_check
          %p150 = pneg %p49
        $region26: #{tpu_custom_call.1} parent=23 // pred_check_branch
          %152 = sbr.rel (%p150) target = $region28
        $region27: #{tpu_custom_call.1} parent=23 // pred_region
          %s153 = sand.u32 %s39, 1
          %s154 = scalar_lea.sflag [#allocation3], %s153
          %s155 = sand.u32 %s39, 1
          %s156 = smul.addr %s155, 64
          %s157 = scalar_lea.vmem [#allocation2], %s156
          %s158 = smul.u32 2, %s23
          %160 = vsyncadd %s154, 0
          %s161 = smul.addr %s22, 8
          %s162 = sadd.s32 %s158, %s161
          %s163 = smul.addr %s162, 8
          %s164 = scalar_lea.hbm %s0, %s163
          %s165 = sshll.u32 %s164, 4
          %s166 = int_to_ptr.hbm [resolvable:$true] %s165
          %s167 = sshll.u32 %s157, 4
          %s168 = int_to_ptr.vmem [resolvable:$true] %s167
          %173 = dma.hbm_to_vmem [thread:$0]  %s166, 1024, %s168, %s154, 256, 256, 16
        $region28: #{tpu_custom_call.1} parent=23 // pred_fallthru
          _
      $region24: #{tpu_custom_call.1} parent=5 // pred_fallthru
        _
      %p174 = scmp.le.s32.totalorder 1, %s15
      %p175 = scmp.lt.s32.totalorder %s15, 3
      %p176 = pnand %p174, %p175
      %p177 = pneg %p176
      // Predicated region
      $region29: #{tpu_custom_call.1} parent=5 // pred_check
        _
      $region30: #{tpu_custom_call.1} parent=5 // pred_check_branch
        %179 = sbr.rel (%p176) target = $region32
      $region31: #{tpu_custom_call.1} parent=5 // pred_region
        %s180 = ssub.s32 %s15, 1
        %s181 = sand.u32 %s42, 1
        %s182 = scalar_lea.sflag [#allocation3], %s181
        %s183 = sand.u32 %s42, 1
        %s184 = smul.addr %s183, 64
        %s185 = scalar_lea.vmem [#allocation2], %s184
        // Predicated region
        $region33: #{tpu_custom_call.1} parent=31 // pred_check
          %p186 = pneg %p55
        $region34: #{tpu_custom_call.1} parent=31 // pred_check_branch
          %188 = sbr.rel (%p186) target = $region36
        $region35: #{tpu_custom_call.1} parent=31 // pred_region
          %190 = dma.done %s182, 1024
        $region36: #{tpu_custom_call.1} parent=31 // pred_fallthru
          _
        %s191 = sand.u32 %s42, 1
        %s192 = scalar_lea.sflag [#allocation3], %s191
        %s193 = sand.u32 %s42, 1
        %s194 = smul.addr %s193, 64
        %s195 = scalar_lea.vmem [#allocation2], %s194
        %p196 = pneg %p55
        %p197 = pneg %p52
        %p198 = pneg %p76
        %p199 = pneg %p73
        %p200 = pneg %p97
        %p201 = pneg %p94
        %p202 = pneg %p125
        %p203 = pneg %p122
        %s204 = sand.u32 %s112, 1
        %s205 = scalar_lea.sflag [#allocation4], %s204
        %s206 = sand.u32 %s112, 1
        %s207 = smul.addr %s206, 64
        %s208 = scalar_lea.vmem [#allocation5], %s207
        %s209 = smul.u32 2, %s25
        %s210 = smul.u32 2, %s25
        %v211 = vld [vmem:[%s185] sm:$0xff]
        %v212 = vld [vmem:[%s185 + $0x8] sm:$0xff]
        %v213 = vld [vmem:[%s185 + $0x10] sm:$0xff]
        %v214 = vld [vmem:[%s185 + $0x18] sm:$0xff]
        %v215 = vld [vmem:[%s185 + $0x20] sm:$0xff]
        %v216 = vld [vmem:[%s185 + $0x28] sm:$0xff]
        %v217 = vld [vmem:[%s185 + $0x30] sm:$0xff]
        %v218 = vld [vmem:[%s185 + $0x38] sm:$0xff]
        %v219 = vadd.f32 %v211, %v213
        %v220 = vadd.f32 %v219, %v215
        %v221 = vadd.f32 %v220, %v217
        %v222 = vrot.slane %v221, 4
        %v223 = vadd.f32 %v221, %v222
        %v224 = vrot.slane %v223, 2
        %v225 = vadd.f32 %v223, %v224
        %v226 = vrot.slane %v225, 1
        %v227 = vadd.f32 %v225, %v226
        %v228 = vadd.f32 %v212, %v214
        %v229 = vadd.f32 %v228, %v216
        %v230 = vadd.f32 %v229, %v218
        %v231 = vrot.slane %v230, 4
        %v232 = vadd.f32 %v230, %v231
        %v233 = vrot.slane %v232, 2
        %v234 = vadd.f32 %v232, %v233
        %v235 = vrot.slane %v234, 1
        %v236 = vadd.f32 %v234, %v235
        %v237 = vmul.f32 %v211, %v211
        %v238 = vmul.f32 %v212, %v212
        %v239 = vmul.f32 %v213, %v213
        %v240 = vmul.f32 %v214, %v214
        %v241 = vmul.f32 %v215, %v215
        %v242 = vmul.f32 %v216, %v216
        %v243 = vmul.f32 %v217, %v217
        %v244 = vmul.f32 %v218, %v218
        %v245 = vadd.f32 %v237, %v239
        %v246 = vadd.f32 %v245, %v241
        %v247 = vadd.f32 %v246, %v243
        %v248 = vrot.slane %v247, 4
        %v249 = vadd.f32 %v247, %v248
        %v250 = vrot.slane %v249, 2
        %v251 = vadd.f32 %v249, %v250
        %v252 = vrot.slane %v251, 1
        %v253 = vadd.f32 %v251, %v252
        %v254 = vadd.f32 %v238, %v240
        %v255 = vadd.f32 %v254, %v242
        %v256 = vadd.f32 %v255, %v244
        %v257 = vrot.slane %v256, 4
        %v258 = vadd.f32 %v256, %v257
        %v259 = vrot.slane %v258, 2
        %v260 = vadd.f32 %v258, %v259
        %v261 = vrot.slane %v260, 1
        %v262 = vadd.f32 %v260, %v261
        %v263 = vmul.f32 %v227, 0.03125
        %v264 = vmul.f32 %v236, 0.03125
        %v265 = vmul.f32 %v253, 0.03125
        %v266 = vmul.f32 %v262, 0.03125
        %v267 = vmul.f32 %v263, %v263
        %v268 = vmul.f32 %v264, %v264
        %v269 = vsub.f32 %v265, %v267
        %v270 = vsub.f32 %v266, %v268
        %v271 = vadd.f32 %v269, 1e-05
        %v272 = vadd.f32 %v270, 1e-05
        %v273 = vrsqrt.pop %v271
        %v274 = vmul.f32 %v273, %v271
        %v275 = vmul.f32 %v274, %v273
        %v276 = vmul.f32 0.5, %v275
        %v277 = vsub.f32 1.5, %v276
        %v278 = vmul.f32 %v273, %v277
        %vm279 = vweird.f32 %v271
        %vm280 = vweird.f32 %v273
        %vm281 = vmor %vm279, %vm280
        %v282 = vsel %vm281, %v273, %v278
        %v283 = vrsqrt.pop %v272
        %v284 = vmul.f32 %v283, %v272
        %v285 = vmul.f32 %v284, %v283
        %v286 = vmul.f32 0.5, %v285
        %v287 = vsub.f32 1.5, %v286
        %v288 = vmul.f32 %v283, %v287
        %vm289 = vweird.f32 %v272
        %vm290 = vweird.f32 %v283
        %vm291 = vmor %vm289, %vm290
        %v292 = vsel %vm291, %v283, %v288
        %v293 = vld [vmem:[%s1] sm:$0xff]
        %v294 = vld [vmem:[%s1 + $0x8] sm:$0xff]
        %v295 = vld [vmem:[%s1 + $0x10] sm:$0xff]
        %v296 = vld [vmem:[%s1 + $0x18] sm:$0xff]
        %v297 = vld [vmem:[%s2] sm:$0xff]
        %v298 = vld [vmem:[%s2 + $0x8] sm:$0xff]
        %v299 = vld [vmem:[%s2 + $0x10] sm:$0xff]
        %v300 = vld [vmem:[%s2 + $0x18] sm:$0xff]
        %v301 = vsub.f32 %v211, %v263
        %v302 = vsub.f32 %v212, %v264
        %v303 = vsub.f32 %v213, %v263
        %v304 = vsub.f32 %v214, %v264
        %v305 = vsub.f32 %v215, %v263
        %v306 = vsub.f32 %v216, %v264
        %v307 = vsub.f32 %v217, %v263
        %v308 = vsub.f32 %v218, %v264
        %v309 = vmul.f32 %v301, %v282
        %v310 = vmul.f32 %v302, %v292
        %v311 = vmul.f32 %v303, %v282
        %v312 = vmul.f32 %v304, %v292
        %v313 = vmul.f32 %v305, %v282
        %v314 = vmul.f32 %v306, %v292
        %v315 = vmul.f32 %v307, %v282
        %v316 = vmul.f32 %v308, %v292
        %318 = vset.pattern.permute.xlu0 0
        %319 = vperm.xlu0 %318, %v293
        %v320 = vpop.permute.xlu0 %319
        %323 = vset.pattern.permute.xlu0 0
        %324 = vperm.xlu0 %323, %v294
        %v325 = vpop.permute.xlu0 %324
        %328 = vset.pattern.permute.xlu0 0
        %329 = vperm.xlu0 %328, %v295
        %v330 = vpop.permute.xlu0 %329
        %333 = vset.pattern.permute.xlu0 0
        %334 = vperm.xlu0 %333, %v296
        %v335 = vpop.permute.xlu0 %334
        %v337 = vmul.f32 %v309, %v320
        %v338 = vmul.f32 %v310, %v320
        %v339 = vmul.f32 %v311, %v325
        %v340 = vmul.f32 %v312, %v325
        %v341 = vmul.f32 %v313, %v330
        %v342 = vmul.f32 %v314, %v330
        %v343 = vmul.f32 %v315, %v335
        %v344 = vmul.f32 %v316, %v335
        %346 = vset.pattern.permute.xlu0 0
        %347 = vperm.xlu0 %346, %v297
        %v348 = vpop.permute.xlu0 %347
        %351 = vset.pattern.permute.xlu0 0
        %352 = vperm.xlu0 %351, %v298
        %v353 = vpop.permute.xlu0 %352
        %356 = vset.pattern.permute.xlu0 0
        %357 = vperm.xlu0 %356, %v299
        %v358 = vpop.permute.xlu0 %357
        %361 = vset.pattern.permute.xlu0 0
        %362 = vperm.xlu0 %361, %v300
        %v363 = vpop.permute.xlu0 %362
        %v365 = vadd.f32 %v337, %v348
        %v366 = vadd.f32 %v338, %v348
        %v367 = vadd.f32 %v339, %v353
        %v368 = vadd.f32 %v340, %v353
        %v369 = vadd.f32 %v341, %v358
        %v370 = vadd.f32 %v342, %v358
        %v371 = vadd.f32 %v343, %v363
        %v372 = vadd.f32 %v344, %v363
        %373 = vst [vmem:[%s208] sm:$0xff] %v365
        %374 = vst [vmem:[%s208 + $0x8] sm:$0xff] %v366
        %375 = vst [vmem:[%s208 + $0x10] sm:$0xff] %v367
        %376 = vst [vmem:[%s208 + $0x18] sm:$0xff] %v368
        %377 = vst [vmem:[%s208 + $0x20] sm:$0xff] %v369
        %378 = vst [vmem:[%s208 + $0x28] sm:$0xff] %v370
        %379 = vst [vmem:[%s208 + $0x30] sm:$0xff] %v371
        %380 = vst [vmem:[%s208 + $0x38] sm:$0xff] %v372
        %s381 = sand.u32 %s112, 1
        %s382 = scalar_lea.sflag [#allocation4], %s381
        %s383 = sand.u32 %s112, 1
        %s384 = smul.addr %s383, 64
        %s385 = scalar_lea.vmem [#allocation5], %s384
        // Predicated region
        $region37: #{tpu_custom_call.1} parent=31 // pred_check
          %p386 = pneg %p122
        $region38: #{tpu_custom_call.1} parent=31 // pred_check_branch
          %388 = sbr.rel (%p386) target = $region40
        $region39: #{tpu_custom_call.1} parent=31 // pred_region
          %s389 = smul.u32 2, %s25
          %391 = vsyncadd %s382, 0
          %s392 = smul.addr %s24, 8
          %s393 = sadd.s32 %s389, %s392
          %s394 = smul.addr %s393, 8
          %s395 = scalar_lea.hbm %s3, %s394
          %s396 = sshll.u32 %s385, 4
          %s397 = int_to_ptr.vmem [resolvable:$true] %s396
          %s398 = sshll.u32 %s395, 4
          %s399 = int_to_ptr.hbm [resolvable:$true] %s398
          %404 = dma.vmem_to_hbm [thread:$0]  %s397, 1024, %s399, %s382, 256, 256, 16
        $region40: #{tpu_custom_call.1} parent=31 // pred_fallthru
          _
      $region32: #{tpu_custom_call.1} parent=5 // pred_fallthru
        _
      %p405 = scmp.le.s32.totalorder 2, %s15
      // Predicated region
      $region41: #{tpu_custom_call.1} parent=5 // pred_check
        %p406 = pneg %p405
      $region42: #{tpu_custom_call.1} parent=5 // pred_check_branch
        %408 = sbr.rel (%p406) target = $region44
      $region43: #{tpu_custom_call.1} parent=5 // pred_region
        %s409 = ssub.s32 %s15, 2
        // Predicated region
        $region45: #{tpu_custom_call.1} parent=43 // pred_check
          %p410 = pneg %p128
        $region46: #{tpu_custom_call.1} parent=43 // pred_check_branch
          %412 = sbr.rel (%p410) target = $region48
        $region47: #{tpu_custom_call.1} parent=43 // pred_region
          %s413 = sand.u32 %s113, 1
          %s414 = scalar_lea.sflag [#allocation4], %s413
          %s415 = sand.u32 %s113, 1
          %s416 = smul.addr %s415, 64
          %s417 = scalar_lea.vmem [#allocation5], %s416
          %419 = dma.done %s414, 1024
        $region48: #{tpu_custom_call.1} parent=43 // pred_fallthru
          _
      $region44: #{tpu_custom_call.1} parent=5 // pred_fallthru
        _
    $region6: #{tpu_custom_call.1} parent=1 // loop_footer
      %s19 = sadd.s32 1, %s15
    $region7: #{tpu_custom_call.1} parent=1 // loop_footer_branch
      %14 = sbr.rel target = $region3
    $region8: #{tpu_custom_call.1} parent=1 // loop_exit
      _
    %420 = vsyncpa [#allocation3], 1
    %s421 = scalar_lea.sflag [#allocation3], 1
    %422 = vsyncpa %s421, 1
    %423 = vsyncpa [#allocation4], 1
    %s424 = scalar_lea.sflag [#allocation4], 1
    %425 = vsyncpa %s424, 1

</llo_original>
